<compile_context>
chip_gen: v7x
topology: tpu7x:2x2x1
jax: 0.10.0
libtpu: 0.0.40
codegen_flags: <defaults>
</compile_context>

<pallas_src>
import jax
import jax.numpy as jnp
from jax.experimental import pallas as pl
from jax.experimental.pallas import tpu as pltpu


def _round_up(x, m):
    return ((x + m - 1) // m) * m


def _conv1x1_kernel(x_ref, w_ref, b_ref, o_ref):
    # x_ref: (1, TN, C) compute dtype   (one batch element, TN pixels)
    # w_ref: (L, C)     compute dtype   (resident across the whole grid)
    # b_ref: (L, 1)     float32         (resident)
    # o_ref: (1, L, TN) out dtype       (lane-dense: TN pixels on the lane axis)
    acc = jax.lax.dot_general(
        w_ref[...], x_ref[0],
        dimension_numbers=(((1,), (1,)), ((), ())),   # contract over C
        preferred_element_type=jnp.float32,
    )                                                  # (L, TN) f32
    o_ref[0] = (acc + b_ref[...]).astype(o_ref.dtype)


def conv1x1_nchw_pallas(x, weight, bias, *, tile_n=512,
                        compute_dtype=jnp.bfloat16, out_dtype=None):
    """Per-pixel linear projection (1x1 conv) with NCHW-ordered output.

    x:      (B, HW, C)   NHWC row-major flattened pixels
    weight: (L, C)       conv weight (L, C, 1, 1) squeezed
    bias:   (L,)
    returns (B, L, HW)   in out_dtype (defaults to x.dtype)
    """
    B, HW, C = x.shape
    L = weight.shape[0]
    out_dtype = out_dtype if out_dtype is not None else x.dtype

    # Pixel tile: lane-dense (multiple of 128), no larger than needed.
    tile = min(max(tile_n, 128), _round_up(HW, 128))
    tile = _round_up(tile, 128)
    HW_pad = _round_up(HW, tile)
    if HW_pad != HW:
        x = jnp.pad(x, ((0, 0), (0, HW_pad - HW), (0, 0)))

    xc = x.astype(compute_dtype)
    wc = weight.astype(compute_dtype)
    b2 = bias.reshape(L, 1).astype(jnp.float32)

    grid = (B, HW_pad // tile)

    csz = jnp.dtype(compute_dtype).itemsize
    osz = jnp.dtype(out_dtype).itemsize
    # double-buffered x block + resident weight/bias + double-buffered out block
    vmem_needed = (2 * tile * C * csz + L * C * csz + L * 4
                   + 2 * L * tile * osz + (2 << 20))
    vmem_limit = int(min(max(2 * vmem_needed, 32 << 20), 48 << 20))

    cost = pl.CostEstimate(
        flops=2 * B * HW_pad * C * L,
        transcendentals=0,
        bytes_accessed=(B * HW_pad * C * csz + L * C * csz
                        + B * L * HW_pad * osz),
    )

    out = pl.pallas_call(
        _conv1x1_kernel,
        out_shape=jax.ShapeDtypeStruct((B, L, HW_pad), out_dtype),
        grid_spec=pltpu.PrefetchScalarGridSpec(
            num_scalar_prefetch=0,
            grid=grid,
            in_specs=[
                pl.BlockSpec((1, tile, C), lambda b, i: (b, i, 0)),
                pl.BlockSpec((L, C), lambda b, i: (0, 0)),     # resident weight
                pl.BlockSpec((L, 1), lambda b, i: (0, 0)),     # resident bias
            ],
            out_specs=pl.BlockSpec((1, L, tile), lambda b, i: (b, 0, i)),
        ),
        compiler_params=pltpu.CompilerParams(
            dimension_semantics=("parallel", "parallel"),
            vmem_limit_bytes=vmem_limit,
        ),
        cost_estimate=cost,
    )(xc, wc, b2)

    if HW_pad != HW:
        out = out[:, :, :HW]
    return out


def linear_classifier_forward(embeddings, weight, bias, *, tokenH, tokenW,
                              in_channels, tile_n=512,
                              compute_dtype=jnp.bfloat16):
    """Matches LinearClassifier.forward.

    embeddings: any shape that reshapes to (-1, tokenH, tokenW, in_channels)
    weight:     (num_labels, in_channels)   (conv weight (L, C, 1, 1) squeezed)
    bias:       (num_labels,)
    returns:    (B, num_labels, tokenH, tokenW)  (NCHW, like the PyTorch module)
    """
    x = embeddings.reshape(-1, tokenH * tokenW, in_channels)   # NHWC flatten
    out = conv1x1_nchw_pallas(x, weight, bias, tile_n=tile_n,
                              compute_dtype=compute_dtype,
                              out_dtype=embeddings.dtype)      # (B, L, HW)
    B, L = out.shape[0], out.shape[1]
    return out.reshape(B, L, tokenH, tokenW)                   # NCHW, free reshape


if __name__ == "__main__":
    # Small shapes consistent with the module.
    B = 2
    tokenH = 16
    tokenW = 16
    in_channels = 32
    num_labels = 4

    key = jax.random.PRNGKey(0)
    k_x, k_w, k_b = jax.random.split(key, 3)

    # Input: patch-token embeddings (B, H*W, C), as produced by a ViT backbone.
    embeddings = jax.random.normal(
        k_x, (B, tokenH * tokenW, in_channels), dtype=jnp.float32)

    # Deterministic Conv2d(1x1) parameters (PyTorch-style uniform(-1/sqrt(C), 1/sqrt(C))).
    bound = 1.0 / (in_channels ** 0.5)
    weight = jax.random.uniform(
        k_w, (num_labels, in_channels), minval=-bound, maxval=bound,
        dtype=jnp.float32)
    bias = jax.random.uniform(
        k_b, (num_labels,), minval=-bound, maxval=bound, dtype=jnp.float32)

    # Reference: plain-JAX 1x1-conv semantics (NCHW output).
    x_nhwc = embeddings.reshape(-1, tokenH, tokenW, in_channels)
    ref = jnp.einsum("bhwc,lc->blhw", x_nhwc, weight) + bias[None, :, None, None]

    # f32-compute path: matches the reference tightly.
    out_f32 = linear_classifier_forward(
        embeddings, weight, bias,
        tokenH=tokenH, tokenW=tokenW, in_channels=in_channels,
        compute_dtype=jnp.float32)
    out_f32 = jax.block_until_ready(out_f32)
    assert out_f32.shape == (B, num_labels, tokenH, tokenW)
    assert jnp.allclose(out_f32, ref, atol=1e-5, rtol=1e-5)

    # Default fast path: bf16 inputs, f32 MXU accumulation.
    out = linear_classifier_forward(
        embeddings, weight, bias,
        tokenH=tokenH, tokenW=tokenW, in_channels=in_channels)
    out = jax.block_until_ready(out)
    assert out.shape == (B, num_labels, tokenH, tokenW)
    assert jnp.allclose(out, ref, atol=5e-2, rtol=5e-2)

    print("KERNEL_OK")
</pallas_src>

<mosaic_0001>
module attributes {stable_mosaic.version = 11 : i64} {
  func.func @_conv1x1_kernel(%arg0: i32, %arg1: i32, %arg2: memref<1x256x32xf32, #tpu.memory_space<vmem>>, %arg3: memref<4x32xf32, #tpu.memory_space<vmem>>, %arg4: memref<4x1xf32, #tpu.memory_space<vmem>>, %arg5: memref<1x4x256xf32, #tpu.memory_space<vmem>>) attributes {dimension_semantics = [#tpu.dimension_semantics<parallel>, #tpu.dimension_semantics<parallel>], iteration_bounds = array<i64: 2, 1>, scalar_prefetch = 0 : i64, scratch_operands = 0 : i64, tpu.core_type = #tpu.core_type<tc>, window_params = [{transform_indices = @transform_0, window_bounds = array<i64: 1, 256, 32>}, {pipeline_mode = #tpu.pipeline_mode<synchronous>, transform_indices = @transform_1, window_bounds = array<i64: 4, 32>}, {pipeline_mode = #tpu.pipeline_mode<synchronous>, transform_indices = @transform_2, window_bounds = array<i64: 4, 1>}, {transform_indices = @transform_3, window_bounds = array<i64: 1, 4, 256>}]} {
    %c0 = arith.constant 0 : index
    %c0_0 = arith.constant 0 : index
    %0 = vector.load %arg3[%c0, %c0_0] : memref<4x32xf32, #tpu.memory_space<vmem>>, vector<4x32xf32>
    %c0_1 = arith.constant 0 : index
    %c0_2 = arith.constant 0 : index
    %c0_3 = arith.constant 0 : index
    %1 = vector.load %arg2[%c0_1, %c0_2, %c0_3] : memref<1x256x32xf32, #tpu.memory_space<vmem>>, vector<1x256x32xf32>
    %2 = vector.shape_cast %1 : vector<1x256x32xf32> to vector<256x32xf32>
    %cst = arith.constant dense<0.000000e+00> : vector<4x256xf32>
    %3 = tpu.matmul %0, %2, %cst {dimension_numbers = #tpu.dot_dimension_numbers<[1], [1], [0], [0], [0, 0, 1, 0], [], []>} : vector<4x32xf32>, vector<256x32xf32>, vector<4x256xf32> -> vector<4x256xf32>
    %c0_4 = arith.constant 0 : index
    %c0_5 = arith.constant 0 : index
    %4 = vector.load %arg4[%c0_4, %c0_5] : memref<4x1xf32, #tpu.memory_space<vmem>>, vector<4x1xf32>
    %5 = vector.broadcast %4 : vector<4x1xf32> to vector<4x256xf32>
    %6 = arith.addf %3, %5 : vector<4x256xf32>
    %c0_6 = arith.constant 0 : index
    %c0_7 = arith.constant 0 : index
    %c0_8 = arith.constant 0 : index
    %7 = vector.load %arg5[%c0_6, %c0_7, %c0_8] : memref<1x4x256xf32, #tpu.memory_space<vmem>>, vector<1x4x256xf32>
    %8 = vector.shape_cast %7 : vector<1x4x256xf32> to vector<4x256xf32>
    %9 = vector.shape_cast %6 : vector<4x256xf32> to vector<1x4x256xf32>
    tpu.vector_store %arg5[%c0_6, %c0_7, %c0_8], %9 {strides = array<i32>} : memref<1x4x256xf32, #tpu.memory_space<vmem>>, vector<1x4x256xf32>,
    return
  }
  func.func @transform_0(%arg0: i32, %arg1: i32) -> (i32, i32, i32) {
    %c0_i32 = arith.constant 0 : i32
    %c0_i32_0 = arith.constant 0 : i32
    return %arg0, %arg1, %c0_i32 : i32, i32, i32
  }
  func.func @transform_1(%arg0: i32, %arg1: i32) -> (i32, i32) {
    %c0_i32 = arith.constant 0 : i32
    %c0_i32_0 = arith.constant 0 : i32
    %c0_i32_1 = arith.constant 0 : i32
    return %c0_i32, %c0_i32_0 : i32, i32
  }
  func.func @transform_2(%arg0: i32, %arg1: i32) -> (i32, i32) {
    %c0_i32 = arith.constant 0 : i32
    %c0_i32_0 = arith.constant 0 : i32
    %c0_i32_1 = arith.constant 0 : i32
    return %c0_i32, %c0_i32_0 : i32, i32
  }
  func.func @transform_3(%arg0: i32, %arg1: i32) -> (i32, i32, i32) {
    %c0_i32 = arith.constant 0 : i32
    %c0_i32_0 = arith.constant 0 : i32
    return %arg0, %c0_i32, %arg1 : i32, i32, i32
  }
}

</mosaic_0001>

<llo_original>
// kernel: tpu_custom_call.1
$region0: #{tpu_custom_call.1}
  #allocation0 [shape = 'u32[]', space=smem, size = 0x4, offset = 0x4, fixed_abs, tag = 'smem constant byte address 0x4 - core index']
  #allocation1 [shape = 'u32[144,128]{1,0:T(1,128)}', space=vmem, size = 0x12000, scoped, tag = 'internal scratch']
  %s0 = inlined_call_operand.vmem [shape: f32[2,256,32], index: 0, kind: input, shape index: {}]
  %s1 = inlined_call_operand.vmem [shape: f32[4,32], index: 1, kind: input, shape index: {}]
  %s2 = inlined_call_operand.vmem [shape: f32[4,1], index: 2, kind: input, shape index: {}]
  %s3 = inlined_call_operand.hbm [shape: f32[2,4,256], index: 3, kind: output, shape index: {}]
  %s4 = sld [smem:[#allocation0]]
  $region45: #{tpu_custom_call.1} parent=0
    _
  %s6 = ssub.s32 1, %s4
  %s7 = scalar_select 0, %s6, %s4
  $region1: #{tpu_custom_call.1} parent=0
    #allocation2 [shape = 'u8[8192]{0}', space=vmem, size = 0x2000, scoped, tag = 'output window, operand 0']
    #allocation3 [shape = 's32[2]{0}', space=sflag, size = 0x8, scoped, tag = 'scoped memory for tpu_custom_call.1']
    %8 = vsyncpa [#allocation3], 0
    %s9 = scalar_lea.sflag [#allocation3], 1
    %10 = vsyncpa %s9, 0
    loop: start=0, step=1, limit=4
    $region2: #{tpu_custom_call.1} parent=1 // loop_pre_header
      _
    $region3: #{tpu_custom_call.1} parent=1 // loop_header
      %s12 = sphi 0, %s16
      %p13 = scmp.ge.s32.totalorder %s12, 4
      %s19 = sphi 0, %s31
      %s20 = sphi 0, %s27
      %s21 = sphi 0, %s19
      %s22 = sphi 0, %s20
      %s23 = sphi 0, %s21
      %s24 = sphi 0, %s22
      %s36 = sphi 0, %s38
      %s39 = sphi 0, %s36
      %s40 = sphi 0, %s39
      %s56 = sphi 0, %s40
      %s60 = sphi 0, %s60
      %s62 = sphi 0, %s60
      %s63 = sphi 0, %s62
      %s77 = sphi 0, %s63
      %s81 = sphi 0, %s81
      %s83 = sphi 0, %s81
      %s84 = sphi 0, %s83
      %s98 = sphi 0, %s84
      %s106 = sphi 0, %s108
      %s109 = sphi 0, %s106
      %s110 = sphi 0, %s109
      %s126 = sphi 0, %s110
    $region4: #{tpu_custom_call.1} parent=1 // loop_header_branch
      %15 = sbr.rel (%p13) target = $region8
    $region5: #{tpu_custom_call.1} parent=1 // loop_body
      %s17 = ssub.s32 %s12, 1
      %s18 = ssub.s32 %s12, 2
      %s25 = sadd.s32 1, %s20
      %p26 = scmp.ge.s32.totalorder %s25, 1
      %s27 = scalar_select %p26, 0, %s25
      %s28 = sadd.s32 1, %s19
      %s29 = scalar_select %p26, %s28, %s19
      %p30 = scmp.ge.s32.totalorder %s29, 2
      %s31 = scalar_select %p30, 0, %s29
      %s32 = ssub.s32 %s19, %s31
      %s33 = ssub.s32 %s20, %s27
      %s34 = sor.u32 %s32, %s33
      %p35 = scmp.eq.s32.totalorder %s34, 0
      %s37 = sadd.s32 %s36, 1
      %s38 = scalar_select %p35, %s36, %s37
      %p41 = pneg %p35
      %p42 = scmp.eq.s32.totalorder %s12, 1
      %p43 = por %p41, %p42
      %p44 = scmp.ne.s32.totalorder %s36, %s39
      %p45 = scmp.eq.s32.totalorder %s12, 0
      %p46 = por %p44, %p45
      %p47 = scmp.ne.s32.totalorder %s36, %s39
      %p48 = scmp.eq.s32.totalorder %s17, 1
      %p49 = por %p47, %p48
      %p50 = scmp.ne.s32.totalorder %s39, %s40
      %p51 = scmp.eq.s32.totalorder %s17, 0
      %p52 = por %p50, %p51
      %p53 = scmp.ne.s32.totalorder %s39, %s40
      %p54 = scmp.eq.s32.totalorder %s18, 1
      %p55 = por %p53, %p54
      %p57 = scmp.ne.s32.totalorder %s40, %s56
      %p58 = scmp.eq.s32.totalorder %s18, 0
      %p59 = por %p57, %p58
      %s61 = sadd.s32 %s60, 1
      %p64 = scmp.eq.s32.totalorder %s12, 1
      %p65 = scmp.ne.s32.totalorder %s60, %s62
      %p66 = scmp.eq.s32.totalorder %s12, 0
      %p67 = por %p65, %p66
      %p68 = scmp.ne.s32.totalorder %s60, %s62
      %p69 = scmp.eq.s32.totalorder %s17, 1
      %p70 = por %p68, %p69
      %p71 = scmp.ne.s32.totalorder %s62, %s63
      %p72 = scmp.eq.s32.totalorder %s17, 0
      %p73 = por %p71, %p72
      %p74 = scmp.ne.s32.totalorder %s62, %s63
      %p75 = scmp.eq.s32.totalorder %s18, 1
      %p76 = por %p74, %p75
      %p78 = scmp.ne.s32.totalorder %s63, %s77
      %p79 = scmp.eq.s32.totalorder %s18, 0
      %p80 = por %p78, %p79
      %s82 = sadd.s32 %s81, 1
      %p85 = scmp.eq.s32.totalorder %s12, 1
      %p86 = scmp.ne.s32.totalorder %s81, %s83
      %p87 = scmp.eq.s32.totalorder %s12, 0
      %p88 = por %p86, %p87
      %p89 = scmp.ne.s32.totalorder %s81, %s83
      %p90 = scmp.eq.s32.totalorder %s17, 1
      %p91 = por %p89, %p90
      %p92 = scmp.ne.s32.totalorder %s83, %s84
      %p93 = scmp.eq.s32.totalorder %s17, 0
      %p94 = por %p92, %p93
      %p95 = scmp.ne.s32.totalorder %s83, %s84
      %p96 = scmp.eq.s32.totalorder %s18, 1
      %p97 = por %p95, %p96
      %p99 = scmp.ne.s32.totalorder %s84, %s98
      %p100 = scmp.eq.s32.totalorder %s18, 0
      %p101 = por %p99, %p100
      %s102 = ssub.s32 %s19, %s31
      %s103 = ssub.s32 %s20, %s27
      %s104 = sor.u32 %s102, %s103
      %p105 = scmp.eq.s32.totalorder %s104, 0
      %s107 = sadd.s32 %s106, 1
      %s108 = scalar_select %p105, %s106, %s107
      %p111 = pneg %p105
      %p112 = scmp.eq.s32.totalorder %s12, 1
      %p113 = por %p111, %p112
      %p114 = scmp.ne.s32.totalorder %s106, %s109
      %p115 = scmp.eq.s32.totalorder %s12, 0
      %p116 = por %p114, %p115
      %p117 = scmp.ne.s32.totalorder %s106, %s109
      %p118 = scmp.eq.s32.totalorder %s17, 1
      %p119 = por %p117, %p118
      %p120 = scmp.ne.s32.totalorder %s109, %s110
      %p121 = scmp.eq.s32.totalorder %s17, 0
      %p122 = por %p120, %p121
      %p123 = scmp.ne.s32.totalorder %s109, %s110
      %p124 = scmp.eq.s32.totalorder %s18, 1
      %p125 = por %p123, %p124
      %p127 = scmp.ne.s32.totalorder %s110, %s126
      %p128 = scmp.eq.s32.totalorder %s18, 0
      %p129 = por %p127, %p128
      %p130 = scmp.le.s32.totalorder 1, %s12
      %p131 = scmp.lt.s32.totalorder %s12, 3
      %p132 = pnand %p130, %p131
      %p133 = pneg %p132
      // Predicated region
      $region9: #{tpu_custom_call.1} parent=5 // pred_check
        _
      $region10: #{tpu_custom_call.1} parent=5 // pred_check_branch
        %135 = sbr.rel (%p132) target = $region12
      $region11: #{tpu_custom_call.1} parent=5 // pred_region
        %s136 = ssub.s32 %s12, 1
        // Predicated region
        $region13: #{tpu_custom_call.1} parent=11 // pred_check
          %p137 = pneg %p73
        $region14: #{tpu_custom_call.1} parent=11 // pred_check_branch
          %139 = sbr.rel (%p137) target = $region16
        $region15: #{tpu_custom_call.1} parent=11 // pred_region
          _
        $region16: #{tpu_custom_call.1} parent=11 // pred_fallthru
          _
        // Predicated region
        $region17: #{tpu_custom_call.1} parent=11 // pred_check
          %p140 = pneg %p94
        $region18: #{tpu_custom_call.1} parent=11 // pred_check_branch
          %142 = sbr.rel (%p140) target = $region20
        $region19: #{tpu_custom_call.1} parent=11 // pred_region
          _
        $region20: #{tpu_custom_call.1} parent=11 // pred_fallthru
          _
      $region12: #{tpu_custom_call.1} parent=5 // pred_fallthru
        _
      %p143 = scmp.lt.s32.totalorder %s12, 2
      // Predicated region
      $region21: #{tpu_custom_call.1} parent=5 // pred_check
        %p144 = pneg %p143
      $region22: #{tpu_custom_call.1} parent=5 // pred_check_branch
        %146 = sbr.rel (%p144) target = $region24
      $region23: #{tpu_custom_call.1} parent=5 // pred_region
        // Predicated region
        $region25: #{tpu_custom_call.1} parent=23 // pred_check
          %p147 = pneg %p46
        $region26: #{tpu_custom_call.1} parent=23 // pred_check_branch
          %149 = sbr.rel (%p147) target = $region28
        $region27: #{tpu_custom_call.1} parent=23 // pred_region
          %s150 = smul.u32 32, %s20
          %p151 = scmp.lt.s32.totalorder %s19, 1
          %s152 = scalar_select %p151, %s19, 1
          %p153 = scmp.lt.s32.totalorder %s150, 31
          %s154 = scalar_select %p153, %s150, 31
          %s155 = smul.addr %s152, 32
          %s156 = sadd.s32 %s154, %s155
          %s157 = smul.addr %s156, 8
          %s158 = scalar_lea.vmem %s0, %s157
          %s159 = smul.u32 32, %s20
        $region28: #{tpu_custom_call.1} parent=23 // pred_fallthru
          _
      $region24: #{tpu_custom_call.1} parent=5 // pred_fallthru
        _
      %p160 = scmp.le.s32.totalorder 1, %s12
      %p161 = scmp.lt.s32.totalorder %s12, 3
      %p162 = pnand %p160, %p161
      %p163 = pneg %p162
      // Predicated region
      $region29: #{tpu_custom_call.1} parent=5 // pred_check
        _
      $region30: #{tpu_custom_call.1} parent=5 // pred_check_branch
        %165 = sbr.rel (%p162) target = $region32
      $region31: #{tpu_custom_call.1} parent=5 // pred_region
        %s166 = ssub.s32 %s12, 1
        %s167 = smul.u32 32, %s22
        %p168 = scmp.lt.s32.totalorder %s21, 1
        %s169 = scalar_select %p168, %s21, 1
        %p170 = scmp.lt.s32.totalorder %s167, 31
        %s171 = scalar_select %p170, %s167, 31
        %s172 = smul.addr %s169, 32
        %s173 = sadd.s32 %s171, %s172
        %s174 = smul.addr %s173, 8
        %s175 = scalar_lea.vmem %s0, %s174
        %p176 = pneg %p52
        %p177 = pneg %p49
        %p178 = pneg %p73
        %p179 = pneg %p70
        %p180 = pneg %p94
        %p181 = pneg %p91
        %p182 = pneg %p122
        %p183 = pneg %p119
        %s184 = sand.u32 %s109, 1
        %s185 = scalar_lea.sflag [#allocation3], %s184
        %s186 = sand.u32 %s109, 1
        %s187 = smul.addr %s186, 8
        %s188 = scalar_lea.vmem [#allocation2], %s187
        %s189 = smul.u32 32, %s22
        %p190 = scmp.lt.s32.totalorder %s21, 1
        %s191 = scalar_select %p190, %s21, 1
        %p192 = scmp.lt.s32.totalorder %s189, 31
        %s193 = scalar_select %p192, %s189, 31
        %s194 = smul.addr %s191, 32
        %s195 = sadd.s32 %s193, %s194
        %s196 = smul.addr %s195, 8
        %s197 = scalar_lea.vmem %s0, %s196
        %s198 = smul.u32 32, %s22
        %s199 = smul.u32 2, %s22
        %v200 = vld [vmem:[%s1] sm:$0xf]
        %v201 = vld [vmem:[%s197] sm:$0xff]
        %v202 = vld [vmem:[%s197 + $0x8] sm:$0xff]
        %v203 = vld [vmem:[%s197 + $0x10] sm:$0xff]
        %v204 = vld [vmem:[%s197 + $0x18] sm:$0xff]
        %v205 = vld [vmem:[%s197 + $0x20] sm:$0xff]
        %v206 = vld [vmem:[%s197 + $0x28] sm:$0xff]
        %v207 = vld [vmem:[%s197 + $0x30] sm:$0xff]
        %v208 = vld [vmem:[%s197 + $0x38] sm:$0xff]
        %v209 = vld [vmem:[%s197 + $0x40] sm:$0xff]
        %v210 = vld [vmem:[%s197 + $0x48] sm:$0xff]
        %v211 = vld [vmem:[%s197 + $0x50] sm:$0xff]
        %v212 = vld [vmem:[%s197 + $0x58] sm:$0xff]
        %v213 = vld [vmem:[%s197 + $0x60] sm:$0xff]
        %v214 = vld [vmem:[%s197 + $0x68] sm:$0xff]
        %v215 = vld [vmem:[%s197 + $0x70] sm:$0xff]
        %v216 = vld [vmem:[%s197 + $0x78] sm:$0xff]
        %v217 = vld [vmem:[%s197 + $0x80] sm:$0xff]
        %v218 = vld [vmem:[%s197 + $0x88] sm:$0xff]
        %v219 = vld [vmem:[%s197 + $0x90] sm:$0xff]
        %v220 = vld [vmem:[%s197 + $0x98] sm:$0xff]
        %v221 = vld [vmem:[%s197 + $0xa0] sm:$0xff]
        %v222 = vld [vmem:[%s197 + $0xa8] sm:$0xff]
        %v223 = vld [vmem:[%s197 + $0xb0] sm:$0xff]
        %v224 = vld [vmem:[%s197 + $0xb8] sm:$0xff]
        %v225 = vld [vmem:[%s197 + $0xc0] sm:$0xff]
        %v226 = vld [vmem:[%s197 + $0xc8] sm:$0xff]
        %v227 = vld [vmem:[%s197 + $0xd0] sm:$0xff]
        %v228 = vld [vmem:[%s197 + $0xd8] sm:$0xff]
        %v229 = vld [vmem:[%s197 + $0xe0] sm:$0xff]
        %v230 = vld [vmem:[%s197 + $0xe8] sm:$0xff]
        %v231 = vld [vmem:[%s197 + $0xf0] sm:$0xff]
        %v232 = vld [vmem:[%s197 + $0xf8] sm:$0xff]
        %v233 = vld [vmem:[%s2] sm:$0xf]
        %235 = vset.pattern.permute.xlu0 0
        %236 = vperm.xlu0 %235, %v233
        %v237 = vpop.permute.xlu0 %236
        %vm239 = vcmask 261120
        %v241 = vsel %vm239, %v200, 0
        %v244 = vsel %vm239, %v201, 0
        %v247 = vsel %vm239, %v202, 0
        %v250 = vsel %vm239, %v203, 0
        %v253 = vsel %vm239, %v204, 0
        %v256 = vsel %vm239, %v205, 0
        %v259 = vsel %vm239, %v206, 0
        %v262 = vsel %vm239, %v207, 0
        %v265 = vsel %vm239, %v208, 0
        %v268 = vsel %vm239, %v209, 0
        %v271 = vsel %vm239, %v210, 0
        %v274 = vsel %vm239, %v211, 0
        %v277 = vsel %vm239, %v212, 0
        %v280 = vsel %vm239, %v213, 0
        %v283 = vsel %vm239, %v214, 0
        %v286 = vsel %vm239, %v215, 0
        %v289 = vsel %vm239, %v216, 0
        %v292 = vsel %vm239, %v217, 0
        %v295 = vsel %vm239, %v218, 0
        %v298 = vsel %vm239, %v219, 0
        %v301 = vsel %vm239, %v220, 0
        %v304 = vsel %vm239, %v221, 0
        %v307 = vsel %vm239, %v222, 0
        %v310 = vsel %vm239, %v223, 0
        %v313 = vsel %vm239, %v224, 0
        %v316 = vsel %vm239, %v225, 0
        %v319 = vsel %vm239, %v226, 0
        %v322 = vsel %vm239, %v227, 0
        %v325 = vsel %vm239, %v228, 0
        %v328 = vsel %vm239, %v229, 0
        %v331 = vsel %vm239, %v230, 0
        %v334 = vsel %vm239, %v231, 0
        %v337 = vsel %vm239, %v232, 0
        %339 = vmatprep.subr.mxu0 0.0
        %340 = vmatpush1.xpose.msra.mxu0 %v244
        %341 = vmatprep.subr.mxu0 0.0
        %342 = vmatpush1.xpose.msra.mxu0 %v247
        %343 = vmatprep.subr.mxu0 0.0
        %344 = vmatpush1.xpose.msra.mxu0 %v250
        %345 = vmatprep.subr.mxu0 0.0
        %346 = vmatpush1.xpose.msra.mxu0 %v253
        %347 = vmatprep.subr.mxu0 0.0
        %348 = vmatpush1.xpose.msra.mxu0 %v256
        %349 = vmatprep.subr.mxu0 0.0
        %350 = vmatpush1.xpose.msra.mxu0 %v259
        %351 = vmatprep.subr.mxu0 0.0
        %352 = vmatpush1.xpose.msra.mxu0 %v262
        %353 = vmatprep.subr.mxu0 0.0
        %354 = vmatpush1.xpose.msra.mxu0 %v265
        %355 = vmatprep.subr.mxu0 0.0
        %356 = vmatpush1.xpose.msra.mxu0 %v268
        %357 = vmatprep.subr.mxu0 0.0
        %358 = vmatpush1.xpose.msra.mxu0 %v271
        %359 = vmatprep.subr.mxu0 0.0
        %360 = vmatpush1.xpose.msra.mxu0 %v274
        %361 = vmatprep.subr.mxu0 0.0
        %362 = vmatpush1.xpose.msra.mxu0 %v277
        %363 = vmatprep.subr.mxu0 0.0
        %364 = vmatpush1.xpose.msra.mxu0 %v280
        %365 = vmatprep.subr.mxu0 0.0
        %366 = vmatpush1.xpose.msra.mxu0 %v283
        %367 = vmatprep.subr.mxu0 0.0
        %368 = vmatpush1.xpose.msra.mxu0 %v286
        %369 = vmatprep.subr.mxu0 0.0
        %370 = vmatpush1.xpose.msra.mxu0 %v289
        %371 = vmatprep.subr.mxu0 0.0
        %372 = vmatpush1.xpose.msra.mxu0 %v292
        %373 = vmatprep.subr.mxu0 0.0
        %374 = vmatpush1.xpose.msra.mxu0 %v295
        %375 = vmatprep.subr.mxu0 0.0
        %376 = vmatpush1.xpose.msra.mxu0 %v298
        %377 = vmatprep.subr.mxu0 0.0
        %378 = vmatpush1.xpose.msra.mxu0 %v301
        %379 = vmatprep.subr.mxu0 0.0
        %380 = vmatpush1.xpose.msra.mxu0 %v304
        %381 = vmatprep.subr.mxu0 0.0
        %382 = vmatpush1.xpose.msra.mxu0 %v307
        %383 = vmatprep.subr.mxu0 0.0
        %384 = vmatpush1.xpose.msra.mxu0 %v310
        %385 = vmatprep.subr.mxu0 0.0
        %386 = vmatpush1.xpose.msra.mxu0 %v313
        %387 = vmatprep.subr.mxu0 0.0
        %388 = vmatpush1.xpose.msra.mxu0 %v316
        %389 = vmatprep.subr.mxu0 0.0
        %390 = vmatpush1.xpose.msra.mxu0 %v319
        %391 = vmatprep.subr.mxu0 0.0
        %392 = vmatpush1.xpose.msra.mxu0 %v322
        %393 = vmatprep.subr.mxu0 0.0
        %394 = vmatpush1.xpose.msra.mxu0 %v325
        %395 = vmatprep.subr.mxu0 0.0
        %396 = vmatpush1.xpose.msra.mxu0 %v328
        %397 = vmatprep.subr.mxu0 0.0
        %398 = vmatpush1.xpose.msra.mxu0 %v331
        %399 = vmatprep.subr.mxu0 0.0
        %400 = vmatpush1.xpose.msra.mxu0 %v334
        %401 = vmatprep.subr.mxu0 0.0
        %402 = vmatpush1.xpose.msra.mxu0 %v337
        %403 = vmatprep.mubr.f32.mxu0 0.0
        %404 = vmatmul.mubr.f32.gmra.mrb[0].mxu0 %v241
        %v405 = vpop.f32.mrb[0].mxu0
        %v406 = vadd.f32 %v237, %v405
        %v407 = vpop.f32.mrb[0].mxu0
        %v408 = vadd.f32 %v237, %v407
        %409 = vdwg.mxu0
        %v412 = vcombine.low %v406, %v408
        %414 = vst [vmem:[%s188] sm:$0xff] %v412
        %s415 = sand.u32 %s109, 1
        %s416 = scalar_lea.sflag [#allocation3], %s415
        %s417 = sand.u32 %s109, 1
        %s418 = smul.addr %s417, 8
        %s419 = scalar_lea.vmem [#allocation2], %s418
        // Predicated region
        $region33: #{tpu_custom_call.1} parent=31 // pred_check
          %p420 = pneg %p119
        $region34: #{tpu_custom_call.1} parent=31 // pred_check_branch
          %422 = sbr.rel (%p420) target = $region36
        $region35: #{tpu_custom_call.1} parent=31 // pred_region
          %s423 = smul.u32 2, %s22
          %s425 = ssub.s32 128, 128
          %426 = vsyncadd %s416, %s425
          %s427 = smul.addr %s21, 2
          %s428 = sadd.s32 %s423, %s427
          %s429 = smul.addr %s428, 64
          %s430 = scalar_lea.hbm %s3, %s429
          %s432 = sshll.u32 %s419, 4
          %s433 = int_to_ptr.vmem [resolvable:$true] %s432
          %435 = dma.vmem_to_hbm [thread:$0]  %s433, 128, %s430, %s416
        $region36: #{tpu_custom_call.1} parent=31 // pred_fallthru
          _
      $region32: #{tpu_custom_call.1} parent=5 // pred_fallthru
        _
      %p436 = scmp.le.s32.totalorder 2, %s12
      // Predicated region
      $region37: #{tpu_custom_call.1} parent=5 // pred_check
        %p437 = pneg %p436
      $region38: #{tpu_custom_call.1} parent=5 // pred_check_branch
        %439 = sbr.rel (%p437) target = $region40
      $region39: #{tpu_custom_call.1} parent=5 // pred_region
        %s440 = ssub.s32 %s12, 2
        // Predicated region
        $region41: #{tpu_custom_call.1} parent=39 // pred_check
          %p441 = pneg %p125
        $region42: #{tpu_custom_call.1} parent=39 // pred_check_branch
          %443 = sbr.rel (%p441) target = $region44
        $region43: #{tpu_custom_call.1} parent=39 // pred_region
          %s444 = sand.u32 %s110, 1
          %s445 = scalar_lea.sflag [#allocation3], %s444
          %s446 = sand.u32 %s110, 1
          %s447 = smul.addr %s446, 8
          %s448 = scalar_lea.vmem [#allocation2], %s447
          %449 = dma.done %s445, 128
        $region44: #{tpu_custom_call.1} parent=39 // pred_fallthru
          _
      $region40: #{tpu_custom_call.1} parent=5 // pred_fallthru
        _
    $region6: #{tpu_custom_call.1} parent=1 // loop_footer
      %s16 = sadd.s32 1, %s12
    $region7: #{tpu_custom_call.1} parent=1 // loop_footer_branch
      %11 = sbr.rel target = $region3
    $region8: #{tpu_custom_call.1} parent=1 // loop_exit
      _
    %450 = vsyncpa [#allocation3], 1
    %s451 = scalar_lea.sflag [#allocation3], 1
    %452 = vsyncpa %s451, 1

</llo_original>
